<compile_context>
chip_gen: v5e
topology: v5e:2x2
jax: 0.10.0
libtpu: 0.0.40
codegen_flags: <defaults>
</compile_context>

<pallas_src>
import functools

import jax
import jax.numpy as jnp
from jax.experimental import pallas as pl
from jax.experimental.pallas import tpu as pltpu

LANE = 128     # vreg lane width
SUBLANE = 8    # vreg sublane count


def _round_up(x, m):
    return ((x + m - 1) // m) * m


# ------------------------- fused RNN + FC head kernel -------------------------
def fused_rnn_fc_kernel(x_ref, wih_ref, whh_ref, b_ref, wfc_ref, bfc_ref, out_ref):
    # x_ref:   (T, Bp, Dp)   time-major, zero-padded input sequence
    # wih_ref: (L, Dp, Hp)   stacked, pre-transposed, zero-padded W_ih^T
    # whh_ref: (L, Hp, Hp)   stacked, pre-transposed, zero-padded W_hh^T
    # b_ref:   (L, 1, Hp)    combined (b_ih + b_hh), zero-padded
    # wfc_ref: (Hp, LANE)    padded W_fc^T (only column 0 is real)
    # bfc_ref: (1, LANE)     padded b_fc   (only element [0, 0] is real)
    # out_ref: (Bp, LANE)    lane-dense output; column 0 holds the prediction
    T, Bp, Dp = x_ref.shape
    L = wih_ref.shape[0]

    # ----- layer 0: input projection hoisted out of the recurrence -----
    pre0 = (
        jnp.dot(x_ref[...].reshape(T * Bp, Dp), wih_ref[0],
                preferred_element_type=jnp.float32)
        + b_ref[0]
    )
    w_hh = whh_ref[0]
    hs = [jnp.tanh(pre0[0:Bp, :])]          # t = 0 peeled: h_prev == 0
    for t in range(1, T):                    # static unroll, values stay in vregs
        hs.append(jnp.tanh(
            pre0[t * Bp:(t + 1) * Bp, :]
            + jnp.dot(hs[-1], w_hh, preferred_element_type=jnp.float32)))

    # ----- layers 1..L-1: per-step input projection -> wavefront dataflow -----
    for l in range(1, L):
        w_ih = wih_ref[l]
        w_hh = whh_ref[l]
        b = b_ref[l]
        nhs = [jnp.tanh(
            jnp.dot(hs[0], w_ih, preferred_element_type=jnp.float32) + b)]
        for t in range(1, T):
            pre = jnp.dot(hs[t], w_ih, preferred_element_type=jnp.float32) + b
            nhs.append(jnp.tanh(
                pre + jnp.dot(nhs[-1], w_hh, preferred_element_type=jnp.float32)))
        hs = nhs

    # FC head on the last timestep's hidden state (in-kernel epilogue).
    out_ref[...] = (
        jnp.dot(hs[-1], wfc_ref[...], preferred_element_type=jnp.float32)
        + bfc_ref[...]
    )


# --------------------- one-time parameter preparation --------------------------
def prepare_params(params, input_size, hidden_size):
    """Transpose / combine / zero-pad / stack all weights once (not per call)."""
    num_layers = len(params["rnn_layers"])
    Hp = _round_up(hidden_size, LANE)
    assert input_size <= Hp, "input_size must fit in the padded hidden width"
    Dp = Hp  # pad the input feature dim to the same padded width as hidden

    wih = jnp.zeros((num_layers, Dp, Hp), jnp.float32)
    whh = jnp.zeros((num_layers, Hp, Hp), jnp.float32)
    b = jnp.zeros((num_layers, 1, Hp), jnp.float32)
    for l, (w_ih, w_hh, b_ih, b_hh) in enumerate(params["rnn_layers"]):
        d_in = w_ih.shape[1]
        wih = wih.at[l, :d_in, :hidden_size].set(jnp.transpose(w_ih))
        whh = whh.at[l, :hidden_size, :hidden_size].set(jnp.transpose(w_hh))
        b = b.at[l, 0, :hidden_size].set(b_ih + b_hh)

    w_fc, b_fc = params["fc"]
    wfc = jnp.zeros((Hp, LANE), jnp.float32).at[:hidden_size, :1].set(
        jnp.transpose(w_fc))
    bfc = jnp.zeros((1, LANE), jnp.float32).at[0, 0].set(b_fc[0])

    return {"wih": wih, "whh": whh, "b": b, "wfc": wfc, "bfc": bfc,
            "Dp": Dp, "Hp": Hp}


# ------------------------------ full forward pass ------------------------------
def baseball_rnn_forward(x_btd, prep):
    """x_btd: (B, T, input_size) batch-first, like the PyTorch module."""
    B, T, D = x_btd.shape
    Bp = _round_up(max(B, SUBLANE), SUBLANE)
    Dp, Hp = prep["Dp"], prep["Hp"]
    L = prep["wih"].shape[0]

    # batch-first -> time-major; pad batch to sublane multiple, features to 128.
    # allow_input_fusion lets XLA fuse this pad/transpose into the kernel operand.
    x_tbd = jnp.transpose(x_btd, (1, 0, 2)).astype(jnp.float32)
    x_pad = jnp.pad(x_tbd, ((0, 0), (0, Bp - B), (0, Dp - D)))

    flops = (2 * T * Bp * Dp * Hp                       # layer-0 hoisted projection
             + 2 * (T - 1) * Bp * Hp * Hp               # layer-0 recurrence (t=0 peeled)
             + (L - 1) * (2 * T * Bp * Hp * Hp          # per-step projections
                          + 2 * (T - 1) * Bp * Hp * Hp)  # recurrences (t=0 peeled)
             + 2 * Bp * Hp * LANE)                      # FC head
    cost = pl.CostEstimate(
        flops=flops,
        transcendentals=L * T * Bp * Hp,
        bytes_accessed=4 * (T * Bp * Dp + L * (Dp * Hp + Hp * Hp + Hp)
                            + Hp * LANE + LANE + Bp * LANE),
    )

    out_pad = pl.pallas_call(
        fused_rnn_fc_kernel,
        out_shape=jax.ShapeDtypeStruct((Bp, LANE), jnp.float32),
        in_specs=[
            pl.BlockSpec((T, Bp, Dp), lambda: (0, 0, 0)),
            pl.BlockSpec((L, Dp, Hp), lambda: (0, 0, 0)),
            pl.BlockSpec((L, Hp, Hp), lambda: (0, 0, 0)),
            pl.BlockSpec((L, 1, Hp), lambda: (0, 0, 0)),
            pl.BlockSpec((Hp, LANE), lambda: (0, 0)),
            pl.BlockSpec((1, LANE), lambda: (0, 0)),
        ],
        out_specs=pl.BlockSpec((Bp, LANE), lambda: (0, 0)),
        compiler_params=pltpu.CompilerParams(
            allow_input_fusion=[True, False, False, False, False, False]),
        cost_estimate=cost,
    )(x_pad, prep["wih"], prep["whh"], prep["b"], prep["wfc"], prep["bfc"])

    return out_pad[:B, :1]   # (B, 1): column 0 is the real prediction


# --------------------------------- reference -----------------------------------
def baseball_rnn_reference(x_btd, params):
    B = x_btd.shape[0]
    layer_in = x_btd
    for (w_ih, w_hh, b_ih, b_hh) in params["rnn_layers"]:
        H = w_hh.shape[0]
        h = jnp.zeros((B, H), jnp.float32)
        outs = []
        for t in range(layer_in.shape[1]):
            h = jnp.tanh(layer_in[:, t, :] @ w_ih.T + b_ih + h @ w_hh.T + b_hh)
            outs.append(h)
        layer_in = jnp.stack(outs, axis=1)
    w_fc, b_fc = params["fc"]
    return layer_in[:, -1, :] @ w_fc.T + b_fc


# ----------------------------------- main ---------------------------------------
if __name__ == "__main__":
    B, T, input_size, hidden_size, num_layers = 2, 8, 4, 32, 2

    key = jax.random.PRNGKey(0)
    keys = jax.random.split(key, 4 * num_layers + 3)

    bound = 1.0 / jnp.sqrt(hidden_size)  # PyTorch default uniform init bound
    rnn_layers = []
    k_idx = 0
    for layer in range(num_layers):
        d_in = input_size if layer == 0 else hidden_size
        w_ih = jax.random.uniform(keys[k_idx], (hidden_size, d_in),
                                  minval=-bound, maxval=bound); k_idx += 1
        w_hh = jax.random.uniform(keys[k_idx], (hidden_size, hidden_size),
                                  minval=-bound, maxval=bound); k_idx += 1
        b_ih = jax.random.uniform(keys[k_idx], (hidden_size,),
                                  minval=-bound, maxval=bound); k_idx += 1
        b_hh = jax.random.uniform(keys[k_idx], (hidden_size,),
                                  minval=-bound, maxval=bound); k_idx += 1
        rnn_layers.append((w_ih.astype(jnp.float32), w_hh.astype(jnp.float32),
                           b_ih.astype(jnp.float32), b_hh.astype(jnp.float32)))
    w_fc = jax.random.uniform(keys[k_idx], (1, hidden_size),
                              minval=-bound, maxval=bound).astype(jnp.float32); k_idx += 1
    b_fc = jax.random.uniform(keys[k_idx], (1,),
                              minval=-bound, maxval=bound).astype(jnp.float32); k_idx += 1
    params = {"rnn_layers": rnn_layers, "fc": (w_fc, b_fc)}

    x = jax.random.normal(keys[k_idx], (B, T, input_size), dtype=jnp.float32)

    # One-time parameter prep (transpose / pad / stack), then the fused kernel.
    prep = prepare_params(params, input_size, hidden_size)
    fwd = jax.jit(functools.partial(baseball_rnn_forward, prep=prep))

    pred = jax.block_until_ready(fwd(x))

    ref = baseball_rnn_reference(x, params)
    assert pred.shape == (B, 1)
    assert jnp.allclose(pred, ref, atol=1e-4), (pred, ref)

    print("KERNEL_OK")
</pallas_src>

<mosaic_0001>
module attributes {stable_mosaic.version = 11 : i64} {
  func.func @fused_rnn_fc_kernel(%arg0: memref<8x8x128xf32, #tpu.memory_space<vmem>>, %arg1: memref<2x128x128xf32, #tpu.memory_space<vmem>>, %arg2: memref<2x128x128xf32, #tpu.memory_space<vmem>>, %arg3: memref<2x1x128xf32, #tpu.memory_space<vmem>>, %arg4: memref<128x128xf32, #tpu.memory_space<vmem>>, %arg5: memref<1x128xf32, #tpu.memory_space<vmem>>, %arg6: memref<8x128xf32, #tpu.memory_space<vmem>>) attributes {dimension_semantics = [], scalar_prefetch = 0 : i64, scratch_operands = 0 : i64, tpu.core_type = #tpu.core_type<tc>} {
    %c0 = arith.constant 0 : index
    %c0_0 = arith.constant 0 : index
    %c0_1 = arith.constant 0 : index
    %0 = vector.load %arg0[%c0, %c0_0, %c0_1] : memref<8x8x128xf32, #tpu.memory_space<vmem>>, vector<8x8x128xf32>
    %1 = vector.shape_cast %0 : vector<8x8x128xf32> to vector<64x128xf32>
    %c0_2 = arith.constant 0 : index
    %c0_3 = arith.constant 0 : index
    %c0_4 = arith.constant 0 : index
    %2 = vector.load %arg1[%c0_2, %c0_3, %c0_4] : memref<2x128x128xf32, #tpu.memory_space<vmem>>, vector<1x128x128xf32>
    %3 = vector.shape_cast %2 : vector<1x128x128xf32> to vector<128x128xf32>
    %cst = arith.constant dense<0.000000e+00> : vector<64x128xf32>
    %4 = tpu.matmul %1, %3, %cst {dimension_numbers = #tpu.dot_dimension_numbers<[1], [0], [0], [1], [0, 0, 1, 1], [], []>} : vector<64x128xf32>, vector<128x128xf32>, vector<64x128xf32> -> vector<64x128xf32>
    %c0_5 = arith.constant 0 : index
    %c0_6 = arith.constant 0 : index
    %c0_7 = arith.constant 0 : index
    %5 = vector.load %arg3[%c0_5, %c0_6, %c0_7] : memref<2x1x128xf32, #tpu.memory_space<vmem>>, vector<1x1x128xf32>
    %6 = vector.shape_cast %5 : vector<1x1x128xf32> to vector<1x128xf32>
    %7 = vector.broadcast %6 : vector<1x128xf32> to vector<64x128xf32>
    %8 = arith.addf %4, %7 : vector<64x128xf32>
    %c0_8 = arith.constant 0 : index
    %c0_9 = arith.constant 0 : index
    %c0_10 = arith.constant 0 : index
    %9 = vector.load %arg2[%c0_8, %c0_9, %c0_10] : memref<2x128x128xf32, #tpu.memory_space<vmem>>, vector<1x128x128xf32>
    %10 = vector.shape_cast %9 : vector<1x128x128xf32> to vector<128x128xf32>
    %11 = vector.extract_strided_slice %8 {offsets = [0, 0], sizes = [8, 128], strides = [1, 1]} : vector<64x128xf32> to vector<8x128xf32>
    %12 = math.tanh %11 : vector<8x128xf32>
    %13 = vector.extract_strided_slice %8 {offsets = [8, 0], sizes = [8, 128], strides = [1, 1]} : vector<64x128xf32> to vector<8x128xf32>
    %cst_11 = arith.constant dense<0.000000e+00> : vector<8x128xf32>
    %14 = tpu.matmul %12, %10, %cst_11 {dimension_numbers = #tpu.dot_dimension_numbers<[1], [0], [0], [1], [0, 0, 1, 1], [], []>} : vector<8x128xf32>, vector<128x128xf32>, vector<8x128xf32> -> vector<8x128xf32>
    %15 = arith.addf %13, %14 : vector<8x128xf32>
    %16 = math.tanh %15 : vector<8x128xf32>
    %17 = vector.extract_strided_slice %8 {offsets = [16, 0], sizes = [8, 128], strides = [1, 1]} : vector<64x128xf32> to vector<8x128xf32>
    %cst_12 = arith.constant dense<0.000000e+00> : vector<8x128xf32>
    %18 = tpu.matmul %16, %10, %cst_12 {dimension_numbers = #tpu.dot_dimension_numbers<[1], [0], [0], [1], [0, 0, 1, 1], [], []>} : vector<8x128xf32>, vector<128x128xf32>, vector<8x128xf32> -> vector<8x128xf32>
    %19 = arith.addf %17, %18 : vector<8x128xf32>
    %20 = math.tanh %19 : vector<8x128xf32>
    %21 = vector.extract_strided_slice %8 {offsets = [24, 0], sizes = [8, 128], strides = [1, 1]} : vector<64x128xf32> to vector<8x128xf32>
    %cst_13 = arith.constant dense<0.000000e+00> : vector<8x128xf32>
    %22 = tpu.matmul %20, %10, %cst_13 {dimension_numbers = #tpu.dot_dimension_numbers<[1], [0], [0], [1], [0, 0, 1, 1], [], []>} : vector<8x128xf32>, vector<128x128xf32>, vector<8x128xf32> -> vector<8x128xf32>
    %23 = arith.addf %21, %22 : vector<8x128xf32>
    %24 = math.tanh %23 : vector<8x128xf32>
    %25 = vector.extract_strided_slice %8 {offsets = [32, 0], sizes = [8, 128], strides = [1, 1]} : vector<64x128xf32> to vector<8x128xf32>
    %cst_14 = arith.constant dense<0.000000e+00> : vector<8x128xf32>
    %26 = tpu.matmul %24, %10, %cst_14 {dimension_numbers = #tpu.dot_dimension_numbers<[1], [0], [0], [1], [0, 0, 1, 1], [], []>} : vector<8x128xf32>, vector<128x128xf32>, vector<8x128xf32> -> vector<8x128xf32>
    %27 = arith.addf %25, %26 : vector<8x128xf32>
    %28 = math.tanh %27 : vector<8x128xf32>
    %29 = vector.extract_strided_slice %8 {offsets = [40, 0], sizes = [8, 128], strides = [1, 1]} : vector<64x128xf32> to vector<8x128xf32>
    %cst_15 = arith.constant dense<0.000000e+00> : vector<8x128xf32>
    %30 = tpu.matmul %28, %10, %cst_15 {dimension_numbers = #tpu.dot_dimension_numbers<[1], [0], [0], [1], [0, 0, 1, 1], [], []>} : vector<8x128xf32>, vector<128x128xf32>, vector<8x128xf32> -> vector<8x128xf32>
    %31 = arith.addf %29, %30 : vector<8x128xf32>
    %32 = math.tanh %31 : vector<8x128xf32>
    %33 = vector.extract_strided_slice %8 {offsets = [48, 0], sizes = [8, 128], strides = [1, 1]} : vector<64x128xf32> to vector<8x128xf32>
    %cst_16 = arith.constant dense<0.000000e+00> : vector<8x128xf32>
    %34 = tpu.matmul %32, %10, %cst_16 {dimension_numbers = #tpu.dot_dimension_numbers<[1], [0], [0], [1], [0, 0, 1, 1], [], []>} : vector<8x128xf32>, vector<128x128xf32>, vector<8x128xf32> -> vector<8x128xf32>
    %35 = arith.addf %33, %34 : vector<8x128xf32>
    %36 = math.tanh %35 : vector<8x128xf32>
    %37 = vector.extract_strided_slice %8 {offsets = [56, 0], sizes = [8, 128], strides = [1, 1]} : vector<64x128xf32> to vector<8x128xf32>
    %cst_17 = arith.constant dense<0.000000e+00> : vector<8x128xf32>
    %38 = tpu.matmul %36, %10, %cst_17 {dimension_numbers = #tpu.dot_dimension_numbers<[1], [0], [0], [1], [0, 0, 1, 1], [], []>} : vector<8x128xf32>, vector<128x128xf32>, vector<8x128xf32> -> vector<8x128xf32>
    %39 = arith.addf %37, %38 : vector<8x128xf32>
    %40 = math.tanh %39 : vector<8x128xf32>
    %c1 = arith.constant 1 : index
    %c0_18 = arith.constant 0 : index
    %c0_19 = arith.constant 0 : index
    %41 = vector.load %arg1[%c1, %c0_18, %c0_19] : memref<2x128x128xf32, #tpu.memory_space<vmem>>, vector<1x128x128xf32>
    %42 = vector.shape_cast %41 : vector<1x128x128xf32> to vector<128x128xf32>
    %c1_20 = arith.constant 1 : index
    %c0_21 = arith.constant 0 : index
    %c0_22 = arith.constant 0 : index
    %43 = vector.load %arg2[%c1_20, %c0_21, %c0_22] : memref<2x128x128xf32, #tpu.memory_space<vmem>>, vector<1x128x128xf32>
    %44 = vector.shape_cast %43 : vector<1x128x128xf32> to vector<128x128xf32>
    %c1_23 = arith.constant 1 : index
    %c0_24 = arith.constant 0 : index
    %c0_25 = arith.constant 0 : index
    %45 = vector.load %arg3[%c1_23, %c0_24, %c0_25] : memref<2x1x128xf32, #tpu.memory_space<vmem>>, vector<1x1x128xf32>
    %46 = vector.shape_cast %45 : vector<1x1x128xf32> to vector<1x128xf32>
    %cst_26 = arith.constant dense<0.000000e+00> : vector<8x128xf32>
    %47 = tpu.matmul %12, %42, %cst_26 {dimension_numbers = #tpu.dot_dimension_numbers<[1], [0], [0], [1], [0, 0, 1, 1], [], []>} : vector<8x128xf32>, vector<128x128xf32>, vector<8x128xf32> -> vector<8x128xf32>
    %48 = vector.broadcast %46 : vector<1x128xf32> to vector<8x128xf32>
    %49 = arith.addf %47, %48 : vector<8x128xf32>
    %50 = math.tanh %49 : vector<8x128xf32>
    %cst_27 = arith.constant dense<0.000000e+00> : vector<8x128xf32>
    %51 = tpu.matmul %16, %42, %cst_27 {dimension_numbers = #tpu.dot_dimension_numbers<[1], [0], [0], [1], [0, 0, 1, 1], [], []>} : vector<8x128xf32>, vector<128x128xf32>, vector<8x128xf32> -> vector<8x128xf32>
    %52 = vector.broadcast %46 : vector<1x128xf32> to vector<8x128xf32>
    %53 = arith.addf %51, %52 : vector<8x128xf32>
    %cst_28 = arith.constant dense<0.000000e+00> : vector<8x128xf32>
    %54 = tpu.matmul %50, %44, %cst_28 {dimension_numbers = #tpu.dot_dimension_numbers<[1], [0], [0], [1], [0, 0, 1, 1], [], []>} : vector<8x128xf32>, vector<128x128xf32>, vector<8x128xf32> -> vector<8x128xf32>
    %55 = arith.addf %53, %54 : vector<8x128xf32>
    %56 = math.tanh %55 : vector<8x128xf32>
    %cst_29 = arith.constant dense<0.000000e+00> : vector<8x128xf32>
    %57 = tpu.matmul %20, %42, %cst_29 {dimension_numbers = #tpu.dot_dimension_numbers<[1], [0], [0], [1], [0, 0, 1, 1], [], []>} : vector<8x128xf32>, vector<128x128xf32>, vector<8x128xf32> -> vector<8x128xf32>
    %58 = vector.broadcast %46 : vector<1x128xf32> to vector<8x128xf32>
    %59 = arith.addf %57, %58 : vector<8x128xf32>
    %cst_30 = arith.constant dense<0.000000e+00> : vector<8x128xf32>
    %60 = tpu.matmul %56, %44, %cst_30 {dimension_numbers = #tpu.dot_dimension_numbers<[1], [0], [0], [1], [0, 0, 1, 1], [], []>} : vector<8x128xf32>, vector<128x128xf32>, vector<8x128xf32> -> vector<8x128xf32>
    %61 = arith.addf %59, %60 : vector<8x128xf32>
    %62 = math.tanh %61 : vector<8x128xf32>
    %cst_31 = arith.constant dense<0.000000e+00> : vector<8x128xf32>
    %63 = tpu.matmul %24, %42, %cst_31 {dimension_numbers = #tpu.dot_dimension_numbers<[1], [0], [0], [1], [0, 0, 1, 1], [], []>} : vector<8x128xf32>, vector<128x128xf32>, vector<8x128xf32> -> vector<8x128xf32>
    %64 = vector.broadcast %46 : vector<1x128xf32> to vector<8x128xf32>
    %65 = arith.addf %63, %64 : vector<8x128xf32>
    %cst_32 = arith.constant dense<0.000000e+00> : vector<8x128xf32>
    %66 = tpu.matmul %62, %44, %cst_32 {dimension_numbers = #tpu.dot_dimension_numbers<[1], [0], [0], [1], [0, 0, 1, 1], [], []>} : vector<8x128xf32>, vector<128x128xf32>, vector<8x128xf32> -> vector<8x128xf32>
    %67 = arith.addf %65, %66 : vector<8x128xf32>
    %68 = math.tanh %67 : vector<8x128xf32>
    %cst_33 = arith.constant dense<0.000000e+00> : vector<8x128xf32>
    %69 = tpu.matmul %28, %42, %cst_33 {dimension_numbers = #tpu.dot_dimension_numbers<[1], [0], [0], [1], [0, 0, 1, 1], [], []>} : vector<8x128xf32>, vector<128x128xf32>, vector<8x128xf32> -> vector<8x128xf32>
    %70 = vector.broadcast %46 : vector<1x128xf32> to vector<8x128xf32>
    %71 = arith.addf %69, %70 : vector<8x128xf32>
    %cst_34 = arith.constant dense<0.000000e+00> : vector<8x128xf32>
    %72 = tpu.matmul %68, %44, %cst_34 {dimension_numbers = #tpu.dot_dimension_numbers<[1], [0], [0], [1], [0, 0, 1, 1], [], []>} : vector<8x128xf32>, vector<128x128xf32>, vector<8x128xf32> -> vector<8x128xf32>
    %73 = arith.addf %71, %72 : vector<8x128xf32>
    %74 = math.tanh %73 : vector<8x128xf32>
    %cst_35 = arith.constant dense<0.000000e+00> : vector<8x128xf32>
    %75 = tpu.matmul %32, %42, %cst_35 {dimension_numbers = #tpu.dot_dimension_numbers<[1], [0], [0], [1], [0, 0, 1, 1], [], []>} : vector<8x128xf32>, vector<128x128xf32>, vector<8x128xf32> -> vector<8x128xf32>
    %76 = vector.broadcast %46 : vector<1x128xf32> to vector<8x128xf32>
    %77 = arith.addf %75, %76 : vector<8x128xf32>
    %cst_36 = arith.constant dense<0.000000e+00> : vector<8x128xf32>
    %78 = tpu.matmul %74, %44, %cst_36 {dimension_numbers = #tpu.dot_dimension_numbers<[1], [0], [0], [1], [0, 0, 1, 1], [], []>} : vector<8x128xf32>, vector<128x128xf32>, vector<8x128xf32> -> vector<8x128xf32>
    %79 = arith.addf %77, %78 : vector<8x128xf32>
    %80 = math.tanh %79 : vector<8x128xf32>
    %cst_37 = arith.constant dense<0.000000e+00> : vector<8x128xf32>
    %81 = tpu.matmul %36, %42, %cst_37 {dimension_numbers = #tpu.dot_dimension_numbers<[1], [0], [0], [1], [0, 0, 1, 1], [], []>} : vector<8x128xf32>, vector<128x128xf32>, vector<8x128xf32> -> vector<8x128xf32>
    %82 = vector.broadcast %46 : vector<1x128xf32> to vector<8x128xf32>
    %83 = arith.addf %81, %82 : vector<8x128xf32>
    %cst_38 = arith.constant dense<0.000000e+00> : vector<8x128xf32>
    %84 = tpu.matmul %80, %44, %cst_38 {dimension_numbers = #tpu.dot_dimension_numbers<[1], [0], [0], [1], [0, 0, 1, 1], [], []>} : vector<8x128xf32>, vector<128x128xf32>, vector<8x128xf32> -> vector<8x128xf32>
    %85 = arith.addf %83, %84 : vector<8x128xf32>
    %86 = math.tanh %85 : vector<8x128xf32>
    %cst_39 = arith.constant dense<0.000000e+00> : vector<8x128xf32>
    %87 = tpu.matmul %40, %42, %cst_39 {dimension_numbers = #tpu.dot_dimension_numbers<[1], [0], [0], [1], [0, 0, 1, 1], [], []>} : vector<8x128xf32>, vector<128x128xf32>, vector<8x128xf32> -> vector<8x128xf32>
    %88 = vector.broadcast %46 : vector<1x128xf32> to vector<8x128xf32>
    %89 = arith.addf %87, %88 : vector<8x128xf32>
    %cst_40 = arith.constant dense<0.000000e+00> : vector<8x128xf32>
    %90 = tpu.matmul %86, %44, %cst_40 {dimension_numbers = #tpu.dot_dimension_numbers<[1], [0], [0], [1], [0, 0, 1, 1], [], []>} : vector<8x128xf32>, vector<128x128xf32>, vector<8x128xf32> -> vector<8x128xf32>
    %91 = arith.addf %89, %90 : vector<8x128xf32>
    %92 = math.tanh %91 : vector<8x128xf32>
    %c0_41 = arith.constant 0 : index
    %c0_42 = arith.constant 0 : index
    %93 = vector.load %arg4[%c0_41, %c0_42] : memref<128x128xf32, #tpu.memory_space<vmem>>, vector<128x128xf32>
    %cst_43 = arith.constant dense<0.000000e+00> : vector<8x128xf32>
    %94 = tpu.matmul %92, %93, %cst_43 {dimension_numbers = #tpu.dot_dimension_numbers<[1], [0], [0], [1], [0, 0, 1, 1], [], []>} : vector<8x128xf32>, vector<128x128xf32>, vector<8x128xf32> -> vector<8x128xf32>
    %c0_44 = arith.constant 0 : index
    %c0_45 = arith.constant 0 : index
    %95 = vector.load %arg5[%c0_44, %c0_45] : memref<1x128xf32, #tpu.memory_space<vmem>>, vector<1x128xf32>
    %96 = vector.broadcast %95 : vector<1x128xf32> to vector<8x128xf32>
    %97 = arith.addf %94, %96 : vector<8x128xf32>
    %c0_46 = arith.constant 0 : index
    %c0_47 = arith.constant 0 : index
    %98 = vector.load %arg6[%c0_46, %c0_47] : memref<8x128xf32, #tpu.memory_space<vmem>>, vector<8x128xf32>
    tpu.vector_store %arg6[%c0_46, %c0_47], %97 {strides = array<i32>} : memref<8x128xf32, #tpu.memory_space<vmem>>, vector<8x128xf32>,
    return
  }
}

</mosaic_0001>

<llo_original>
// kernel: baseball_rnn_forward.2
$region0: #{baseball_rnn_forward.2}
  #allocation0 [shape = 'u32[]', space=smem, size = 0x4, offset = 0x4, fixed_abs, tag = 'smem constant byte address 0x4 - core index']
  #allocation1 [shape = 'u32[72,128]{1,0:T(1,128)}', space=vmem, size = 0x9000, scoped, tag = 'internal scratch']
  #allocation2 [shape = 'u32[2048]{0}', space=vmem, size = 0x2000, scoped, tag = 'scoped memory for baseball_rnn_forward.2']
  #allocation3 [shape = 'u32[2048]{0}', space=vmem, size = 0x2000, scoped, tag = 'scoped memory for baseball_rnn_forward.2']
  #allocation4 [shape = 'u32[2048]{0}', space=vmem, size = 0x2000, scoped, tag = 'scoped memory for baseball_rnn_forward.2']
  #allocation5 [shape = 'u32[2048]{0}', space=vmem, size = 0x2000, scoped, tag = 'scoped memory for baseball_rnn_forward.2']
  #allocation6 [shape = 'u32[2048]{0}', space=vmem, size = 0x2000, scoped, tag = 'scoped memory for baseball_rnn_forward.2']
  %s0 = inlined_call_operand.hbm [shape: f32[2,128,128], index: 0, kind: input, shape index: {}]
  %s1 = inlined_call_operand.hbm [shape: f32[2,128,128], index: 1, kind: input, shape index: {}]
  %s2 = inlined_call_operand.vmem [shape: f32[2,1,128], index: 2, kind: input, shape index: {}]
  %s3 = inlined_call_operand.hbm [shape: f32[128,128], index: 3, kind: input, shape index: {}]
  %s4 = inlined_call_operand.vmem [shape: f32[1,128], index: 4, kind: input, shape index: {}]
  %s5 = inlined_call_operand.vmem [shape: f32[8,2,4], index: 5, kind: input, shape index: {}]
  %s6 = inlined_call_operand.<no memory space> [shape: f32[], index: 6, kind: input, shape index: {}]
  %s7 = inlined_call_operand.vmem [shape: f32[8,128], index: 7, kind: output, shape index: {}]
  %s8 = sld [smem:[#allocation0]]
  $region46: #{baseball_rnn_forward.2} parent=0
    _
  %s10 = ssub.s32 1, %s8
  %s11 = scalar_select 0, %s10, %s8
  %v12 = vstv %s6
  $region1: #{baseball_rnn_forward.2} parent=0
    #allocation7 [shape = 'u8[131072]{0}', space=vmem, size = 0x20000, scoped, tag = 'input window, operand 1, single buffered']
    #allocation8 [shape = 's32[1]{0}', space=sflag, size = 0x4, scoped, tag = 'scoped memory for baseball_rnn_forward.2']
    #allocation9 [shape = 'u8[131072]{0}', space=vmem, size = 0x20000, scoped, tag = 'input window, operand 2, single buffered']
    #allocation10 [shape = 's32[1]{0}', space=sflag, size = 0x4, scoped, tag = 'scoped memory for baseball_rnn_forward.2']
    #allocation11 [shape = 'u8[65536]{0}', space=vmem, size = 0x10000, scoped, tag = 'input window, operand 4, single buffered']
    #allocation12 [shape = 'u8[32768]{0}', space=vmem, size = 0x8000, dematerialized = true, scoped, tag = 'FusionAdapter Buffer %fusion.1 = f32[8,8,128]{2,1,0:T(8,128)} fusion(%param_5.1, %param_6), kind=kLoop, calls=%fused_computation.1.clone, metadata={op_name="jit(baseball_rnn_forward)/jit(_pad)/pad" stack_frame_id=8}']
    %13 = vsyncpa [#allocation8], 0
    %14 = vsyncpa [#allocation10], 0
    // Predicated region
    $region2: #{baseball_rnn_forward.2} parent=1 // pred_check
      _
    $region3: #{baseball_rnn_forward.2} parent=1 // pred_check_branch
      %16 = sbr.rel (0) target = $region5
    $region4: #{baseball_rnn_forward.2} parent=1 // pred_region
      _
    $region5: #{baseball_rnn_forward.2} parent=1 // pred_fallthru
      _
    // Predicated region
    $region6: #{baseball_rnn_forward.2} parent=1 // pred_check
      _
    $region7: #{baseball_rnn_forward.2} parent=1 // pred_check_branch
      %18 = sbr.rel (0) target = $region9
    $region8: #{baseball_rnn_forward.2} parent=1 // pred_region
      %20 = vsyncadd [#allocation8], 0
      %s21 = sshll.u32 %s0, 4
      %s22 = int_to_ptr.hbm [resolvable:$true] %s21
      %s23 = sshll.u32 [#allocation7], 4
      %s24 = int_to_ptr.vmem [resolvable:$true] %s23
      %29 = dma.hbm_to_vmem [thread:$0]  %s22, 4096, %s24, [#allocation8], 128, 128, 8
    $region9: #{baseball_rnn_forward.2} parent=1 // pred_fallthru
      _
    // Predicated region
    $region10: #{baseball_rnn_forward.2} parent=1 // pred_check
      _
    $region11: #{baseball_rnn_forward.2} parent=1 // pred_check_branch
      %31 = sbr.rel (0) target = $region13
    $region12: #{baseball_rnn_forward.2} parent=1 // pred_region
      %33 = vsyncadd [#allocation10], 0
      %s34 = sshll.u32 %s1, 4
      %s35 = int_to_ptr.hbm [resolvable:$true] %s34
      %s36 = sshll.u32 [#allocation9], 4
      %s37 = int_to_ptr.vmem [resolvable:$true] %s36
      %42 = dma.hbm_to_vmem [thread:$0]  %s35, 4096, %s37, [#allocation10], 128, 128, 8
    $region13: #{baseball_rnn_forward.2} parent=1 // pred_fallthru
      _
    // Predicated region
    $region14: #{baseball_rnn_forward.2} parent=1 // pred_check
      _
    $region15: #{baseball_rnn_forward.2} parent=1 // pred_check_branch
      %44 = sbr.rel (0) target = $region17
    $region16: #{baseball_rnn_forward.2} parent=1 // pred_region
      _
    $region17: #{baseball_rnn_forward.2} parent=1 // pred_fallthru
      _
    // Predicated region
    $region18: #{baseball_rnn_forward.2} parent=1 // pred_check
      _
    $region19: #{baseball_rnn_forward.2} parent=1 // pred_check_branch
      %46 = sbr.rel (0) target = $region21
    $region20: #{baseball_rnn_forward.2} parent=1 // pred_region
      %48 = vsyncadd [#allocation10], 0
      %s49 = sshll.u32 %s3, 4
      %s50 = int_to_ptr.hbm [resolvable:$true] %s49
      %s51 = sshll.u32 [#allocation11], 4
      %s52 = int_to_ptr.vmem [resolvable:$true] %s51
      %57 = dma.hbm_to_vmem [thread:$0]  %s50, 2048, %s52, [#allocation10], 128, 128, 8
    $region21: #{baseball_rnn_forward.2} parent=1 // pred_fallthru
      _
    // Predicated region
    $region22: #{baseball_rnn_forward.2} parent=1 // pred_check
      _
    $region23: #{baseball_rnn_forward.2} parent=1 // pred_check_branch
      %59 = sbr.rel (0) target = $region25
    $region24: #{baseball_rnn_forward.2} parent=1 // pred_region
      _
    $region25: #{baseball_rnn_forward.2} parent=1 // pred_fallthru
      _
    // Predicated region
    $region26: #{baseball_rnn_forward.2} parent=1 // pred_check
      _
    $region27: #{baseball_rnn_forward.2} parent=1 // pred_check_branch
      %61 = sbr.rel (0) target = $region29
    $region28: #{baseball_rnn_forward.2} parent=1 // pred_region
      %63 = dma.done [#allocation8], 4096
    $region29: #{baseball_rnn_forward.2} parent=1 // pred_fallthru
      _
    // Predicated region
    $region30: #{baseball_rnn_forward.2} parent=1 // pred_check
      _
    $region31: #{baseball_rnn_forward.2} parent=1 // pred_check_branch
      %65 = sbr.rel (0) target = $region33
    $region32: #{baseball_rnn_forward.2} parent=1 // pred_region
      %67 = dma.done [#allocation10], 4096
    $region33: #{baseball_rnn_forward.2} parent=1 // pred_fallthru
      _
    // Predicated region
    $region34: #{baseball_rnn_forward.2} parent=1 // pred_check
      _
    $region35: #{baseball_rnn_forward.2} parent=1 // pred_check_branch
      %69 = sbr.rel (0) target = $region37
    $region36: #{baseball_rnn_forward.2} parent=1 // pred_region
      %71 = dma.done [#allocation10], 2048
    $region37: #{baseball_rnn_forward.2} parent=1 // pred_fallthru
      _
    %v72 = vld [vmem:[%s5] sm:$0x3]
    %v73 = vlaneseq
    %v74 = vshrl.u32 %v73, 7
    %vm76 = vcmp.lt.s32.totalorder %v74, 2
    %v77 = vsel %vm76, %v72, %v12
    %v78 = vlaneseq
    %v79 = vand.u32 %v78, 127
    %vm81 = vcmp.lt.s32.totalorder %v79, 4
    %v82 = vsel %vm81, %v77, %v12
    %s84 = ssub.s32 256, 1
    %85 = vst [vmem:[#allocation12] sm:%s84] %v82
    %s86 = scalar_lea.vmem %s5, 2
    %v87 = vld [vmem:[%s86] sm:$0x3]
    %v88 = vlaneseq
    %v89 = vshrl.u32 %v88, 7
    %vm91 = vcmp.lt.s32.totalorder %v89, 2
    %v92 = vsel %vm91, %v87, %v12
    %v93 = vlaneseq
    %v94 = vand.u32 %v93, 127
    %vm96 = vcmp.lt.s32.totalorder %v94, 4
    %v97 = vsel %vm96, %v92, %v12
    %s98 = scalar_lea.vmem [#allocation12], 8
    %s100 = ssub.s32 256, 1
    %101 = vst [vmem:[%s98] sm:%s100] %v97
    %s102 = scalar_lea.vmem %s5, 4
    %v103 = vld [vmem:[%s102] sm:$0x3]
    %v104 = vlaneseq
    %v105 = vshrl.u32 %v104, 7
    %vm107 = vcmp.lt.s32.totalorder %v105, 2
    %v108 = vsel %vm107, %v103, %v12
    %v109 = vlaneseq
    %v110 = vand.u32 %v109, 127
    %vm112 = vcmp.lt.s32.totalorder %v110, 4
    %v113 = vsel %vm112, %v108, %v12
    %s114 = scalar_lea.vmem [#allocation12], 16
    %s116 = ssub.s32 256, 1
    %117 = vst [vmem:[%s114] sm:%s116] %v113
    %s118 = scalar_lea.vmem %s5, 6
    %v119 = vld [vmem:[%s118] sm:$0x3]
    %v120 = vlaneseq
    %v121 = vshrl.u32 %v120, 7
    %vm123 = vcmp.lt.s32.totalorder %v121, 2
    %v124 = vsel %vm123, %v119, %v12
    %v125 = vlaneseq
    %v126 = vand.u32 %v125, 127
    %vm128 = vcmp.lt.s32.totalorder %v126, 4
    %v129 = vsel %vm128, %v124, %v12
    %s130 = scalar_lea.vmem [#allocation12], 24
    %s132 = ssub.s32 256, 1
    %133 = vst [vmem:[%s130] sm:%s132] %v129
    %s134 = scalar_lea.vmem %s5, 8
    %v135 = vld [vmem:[%s134] sm:$0x3]
    %v136 = vlaneseq
    %v137 = vshrl.u32 %v136, 7
    %vm139 = vcmp.lt.s32.totalorder %v137, 2
    %v140 = vsel %vm139, %v135, %v12
    %v141 = vlaneseq
    %v142 = vand.u32 %v141, 127
    %vm144 = vcmp.lt.s32.totalorder %v142, 4
    %v145 = vsel %vm144, %v140, %v12
    %s146 = scalar_lea.vmem [#allocation12], 32
    %s148 = ssub.s32 256, 1
    %149 = vst [vmem:[%s146] sm:%s148] %v145
    %s150 = scalar_lea.vmem %s5, 10
    %v151 = vld [vmem:[%s150] sm:$0x3]
    %v152 = vlaneseq
    %v153 = vshrl.u32 %v152, 7
    %vm155 = vcmp.lt.s32.totalorder %v153, 2
    %v156 = vsel %vm155, %v151, %v12
    %v157 = vlaneseq
    %v158 = vand.u32 %v157, 127
    %vm160 = vcmp.lt.s32.totalorder %v158, 4
    %v161 = vsel %vm160, %v156, %v12
    %s162 = scalar_lea.vmem [#allocation12], 40
    %s164 = ssub.s32 256, 1
    %165 = vst [vmem:[%s162] sm:%s164] %v161
    %s166 = scalar_lea.vmem %s5, 12
    %v167 = vld [vmem:[%s166] sm:$0x3]
    %v168 = vlaneseq
    %v169 = vshrl.u32 %v168, 7
    %vm171 = vcmp.lt.s32.totalorder %v169, 2
    %v172 = vsel %vm171, %v167, %v12
    %v173 = vlaneseq
    %v174 = vand.u32 %v173, 127
    %vm176 = vcmp.lt.s32.totalorder %v174, 4
    %v177 = vsel %vm176, %v172, %v12
    %s178 = scalar_lea.vmem [#allocation12], 48
    %s180 = ssub.s32 256, 1
    %181 = vst [vmem:[%s178] sm:%s180] %v177
    %s182 = scalar_lea.vmem %s5, 14
    %v183 = vld [vmem:[%s182] sm:$0x3]
    %v184 = vlaneseq
    %v185 = vshrl.u32 %v184, 7
    %vm187 = vcmp.lt.s32.totalorder %v185, 2
    %v188 = vsel %vm187, %v183, %v12
    %v189 = vlaneseq
    %v190 = vand.u32 %v189, 127
    %vm192 = vcmp.lt.s32.totalorder %v190, 4
    %v193 = vsel %vm192, %v188, %v12
    %s194 = scalar_lea.vmem [#allocation12], 56
    %s196 = ssub.s32 256, 1
    %197 = vst [vmem:[%s194] sm:%s196] %v193
    %v198 = vld [vmem:[#allocation12] sm:$0xff]
    %v199 = vld [vmem:[#allocation12 + $0x8] sm:$0xff]
    %v200 = vld [vmem:[#allocation12 + $0x10] sm:$0xff]
    %v201 = vld [vmem:[#allocation12 + $0x18] sm:$0xff]
    %v202 = vld [vmem:[#allocation12 + $0x20] sm:$0xff]
    %v203 = vld [vmem:[#allocation12 + $0x28] sm:$0xff]
    %v204 = vld [vmem:[#allocation12 + $0x30] sm:$0xff]
    %v205 = vld [vmem:[#allocation12 + $0x38] sm:$0xff]
    %v206 = vld [vmem:[#allocation7] sm:$0xff]
    %v207 = vld [vmem:[#allocation7 + $0x8] sm:$0xff]
    %v208 = vld [vmem:[#allocation7 + $0x10] sm:$0xff]
    %v209 = vld [vmem:[#allocation7 + $0x18] sm:$0xff]
    %v210 = vld [vmem:[#allocation7 + $0x20] sm:$0xff]
    %v211 = vld [vmem:[#allocation7 + $0x28] sm:$0xff]
    %v212 = vld [vmem:[#allocation7 + $0x30] sm:$0xff]
    %v213 = vld [vmem:[#allocation7 + $0x38] sm:$0xff]
    %v214 = vld [vmem:[#allocation7 + $0x40] sm:$0xff]
    %v215 = vld [vmem:[#allocation7 + $0x48] sm:$0xff]
    %v216 = vld [vmem:[#allocation7 + $0x50] sm:$0xff]
    %v217 = vld [vmem:[#allocation7 + $0x58] sm:$0xff]
    %v218 = vld [vmem:[#allocation7 + $0x60] sm:$0xff]
    %v219 = vld [vmem:[#allocation7 + $0x68] sm:$0xff]
    %v220 = vld [vmem:[#allocation7 + $0x70] sm:$0xff]
    %v221 = vld [vmem:[#allocation7 + $0x78] sm:$0xff]
    %v222 = vld [vmem:[%s2] sm:$0x1]
    %v224 = vperm.slane %v222, 0
    %226 = vmatpush.msra.mxu0 %v221
    %227 = vmatpush.msra.mxu0 %v220
    %228 = vmatpush.msra.mxu0 %v219
    %229 = vmatpush.msra.mxu0 %v218
    %230 = vmatpush.msra.mxu0 %v217
    %231 = vmatpush.msra.mxu0 %v216
    %232 = vmatpush.msra.mxu0 %v215
    %233 = vmatpush.msra.mxu0 %v214
    %234 = vmatpush.msra.mxu0 %v213
    %235 = vmatpush.msra.mxu0 %v212
    %236 = vmatpush.msra.mxu0 %v211
    %237 = vmatpush.msra.mxu0 %v210
    %238 = vmatpush.msra.mxu0 %v209
    %239 = vmatpush.msra.mxu0 %v208
    %240 = vmatpush.msra.mxu0 %v207
    %241 = vmatpush.msra.mxu0 %v206
    %242 = vmatmul.f32.gmra.mxu0 %v198
    %v243 = vpop.f32.mrf.mxu0
    %v244 = vadd.f32 %v224, %v243
    %245 = vmatmul.f32.gmra.mxu0 %v199
    %v246 = vpop.f32.mrf.mxu0
    %v247 = vadd.f32 %v224, %v246
    %248 = vmatmul.f32.gmra.mxu0 %v200
    %v249 = vpop.f32.mrf.mxu0
    %v250 = vadd.f32 %v224, %v249
    %251 = vmatmul.f32.gmra.mxu0 %v201
    %v252 = vpop.f32.mrf.mxu0
    %v253 = vadd.f32 %v224, %v252
    %254 = vmatmul.f32.gmra.mxu0 %v202
    %v255 = vpop.f32.mrf.mxu0
    %v256 = vadd.f32 %v224, %v255
    %257 = vmatmul.f32.gmra.mxu0 %v203
    %v258 = vpop.f32.mrf.mxu0
    %v259 = vadd.f32 %v224, %v258
    %260 = vmatmul.f32.gmra.mxu0 %v204
    %v261 = vpop.f32.mrf.mxu0
    %v262 = vadd.f32 %v224, %v261
    %263 = vmatmul.f32.gmra.mxu0 %v205
    %v264 = vpop.f32.mrf.mxu0
    %v265 = vadd.f32 %v224, %v264
    %266 = vdwg.mxu0
    %v267 = vld [vmem:[#allocation9] sm:$0xff]
    %v268 = vld [vmem:[#allocation9 + $0x8] sm:$0xff]
    %v269 = vld [vmem:[#allocation9 + $0x10] sm:$0xff]
    %v270 = vld [vmem:[#allocation9 + $0x18] sm:$0xff]
    %v271 = vld [vmem:[#allocation9 + $0x20] sm:$0xff]
    %v272 = vld [vmem:[#allocation9 + $0x28] sm:$0xff]
    %v273 = vld [vmem:[#allocation9 + $0x30] sm:$0xff]
    %v274 = vld [vmem:[#allocation9 + $0x38] sm:$0xff]
    %v275 = vld [vmem:[#allocation9 + $0x40] sm:$0xff]
    %v276 = vld [vmem:[#allocation9 + $0x48] sm:$0xff]
    %v277 = vld [vmem:[#allocation9 + $0x50] sm:$0xff]
    %v278 = vld [vmem:[#allocation9 + $0x58] sm:$0xff]
    %v279 = vld [vmem:[#allocation9 + $0x60] sm:$0xff]
    %v280 = vld [vmem:[#allocation9 + $0x68] sm:$0xff]
    %v281 = vld [vmem:[#allocation9 + $0x70] sm:$0xff]
    %v282 = vld [vmem:[#allocation9 + $0x78] sm:$0xff]
    %v283 = vtanh.pop %v244
    %284 = vmatpush.msra.mxu0 %v282
    %285 = vmatpush.msra.mxu0 %v281
    %286 = vmatpush.msra.mxu0 %v280
    %287 = vmatpush.msra.mxu0 %v279
    %288 = vmatpush.msra.mxu0 %v278
    %289 = vmatpush.msra.mxu0 %v277
    %290 = vmatpush.msra.mxu0 %v276
    %291 = vmatpush.msra.mxu0 %v275
    %292 = vmatpush.msra.mxu0 %v274
    %293 = vmatpush.msra.mxu0 %v273
    %294 = vmatpush.msra.mxu0 %v272
    %295 = vmatpush.msra.mxu0 %v271
    %296 = vmatpush.msra.mxu0 %v270
    %297 = vmatpush.msra.mxu0 %v269
    %298 = vmatpush.msra.mxu0 %v268
    %299 = vmatpush.msra.mxu0 %v267
    %300 = vmatmul.f32.gmra.mxu0 %v283
    %v301 = vpop.f32.mrf.mxu0
    %v302 = vadd.f32 0.0, %v301
    %303 = vdwg.mxu0
    %v304 = vadd.f32 %v247, %v302
    %v305 = vtanh.pop %v304
    %306 = vmatpush.msra.mxu0 %v282
    %307 = vmatpush.msra.mxu0 %v281
    %308 = vmatpush.msra.mxu0 %v280
    %309 = vmatpush.msra.mxu0 %v279
    %310 = vmatpush.msra.mxu0 %v278
    %311 = vmatpush.msra.mxu0 %v277
    %312 = vmatpush.msra.mxu0 %v276
    %313 = vmatpush.msra.mxu0 %v275
    %314 = vmatpush.msra.mxu0 %v274
    %315 = vmatpush.msra.mxu0 %v273
    %316 = vmatpush.msra.mxu0 %v272
    %317 = vmatpush.msra.mxu0 %v271
    %318 = vmatpush.msra.mxu0 %v270
    %319 = vmatpush.msra.mxu0 %v269
    %320 = vmatpush.msra.mxu0 %v268
    %321 = vmatpush.msra.mxu0 %v267
    %322 = vmatmul.f32.gmra.mxu0 %v305
    %v323 = vpop.f32.mrf.mxu0
    %v324 = vadd.f32 0.0, %v323
    %325 = vdwg.mxu0
    %v326 = vadd.f32 %v250, %v324
    %v327 = vtanh.pop %v326
    %328 = vmatpush.msra.mxu0 %v282
    %329 = vmatpush.msra.mxu0 %v281
    %330 = vmatpush.msra.mxu0 %v280
    %331 = vmatpush.msra.mxu0 %v279
    %332 = vmatpush.msra.mxu0 %v278
    %333 = vmatpush.msra.mxu0 %v277
    %334 = vmatpush.msra.mxu0 %v276
    %335 = vmatpush.msra.mxu0 %v275
    %336 = vmatpush.msra.mxu0 %v274
    %337 = vmatpush.msra.mxu0 %v273
    %338 = vmatpush.msra.mxu0 %v272
    %339 = vmatpush.msra.mxu0 %v271
    %340 = vmatpush.msra.mxu0 %v270
    %341 = vmatpush.msra.mxu0 %v269
    %342 = vmatpush.msra.mxu0 %v268
    %343 = vmatpush.msra.mxu0 %v267
    %344 = vmatmul.f32.gmra.mxu0 %v327
    %v345 = vpop.f32.mrf.mxu0
    %v346 = vadd.f32 0.0, %v345
    %347 = vdwg.mxu0
    %v348 = vadd.f32 %v253, %v346
    %v349 = vtanh.pop %v348
    %350 = vmatpush.msra.mxu0 %v282
    %351 = vmatpush.msra.mxu0 %v281
    %352 = vmatpush.msra.mxu0 %v280
    %353 = vmatpush.msra.mxu0 %v279
    %354 = vmatpush.msra.mxu0 %v278
    %355 = vmatpush.msra.mxu0 %v277
    %356 = vmatpush.msra.mxu0 %v276
    %357 = vmatpush.msra.mxu0 %v275
    %358 = vmatpush.msra.mxu0 %v274
    %359 = vmatpush.msra.mxu0 %v273
    %360 = vmatpush.msra.mxu0 %v272
    %361 = vmatpush.msra.mxu0 %v271
    %362 = vmatpush.msra.mxu0 %v270
    %363 = vmatpush.msra.mxu0 %v269
    %364 = vmatpush.msra.mxu0 %v268
    %365 = vmatpush.msra.mxu0 %v267
    %366 = vmatmul.f32.gmra.mxu0 %v349
    %v367 = vpop.f32.mrf.mxu0
    %v368 = vadd.f32 0.0, %v367
    %369 = vdwg.mxu0
    %v370 = vadd.f32 %v256, %v368
    %v371 = vtanh.pop %v370
    %372 = vmatpush.msra.mxu0 %v282
    %373 = vmatpush.msra.mxu0 %v281
    %374 = vmatpush.msra.mxu0 %v280
    %375 = vmatpush.msra.mxu0 %v279
    %376 = vmatpush.msra.mxu0 %v278
    %377 = vmatpush.msra.mxu0 %v277
    %378 = vmatpush.msra.mxu0 %v276
    %379 = vmatpush.msra.mxu0 %v275
    %380 = vmatpush.msra.mxu0 %v274
    %381 = vmatpush.msra.mxu0 %v273
    %382 = vmatpush.msra.mxu0 %v272
    %383 = vmatpush.msra.mxu0 %v271
    %384 = vmatpush.msra.mxu0 %v270
    %385 = vmatpush.msra.mxu0 %v269
    %386 = vmatpush.msra.mxu0 %v268
    %387 = vmatpush.msra.mxu0 %v267
    %388 = vmatmul.f32.gmra.mxu0 %v371
    %v389 = vpop.f32.mrf.mxu0
    %v390 = vadd.f32 0.0, %v389
    %391 = vdwg.mxu0
    %v392 = vadd.f32 %v259, %v390
    %v393 = vtanh.pop %v392
    %394 = vmatpush.msra.mxu0 %v282
    %395 = vmatpush.msra.mxu0 %v281
    %396 = vmatpush.msra.mxu0 %v280
    %397 = vmatpush.msra.mxu0 %v279
    %398 = vmatpush.msra.mxu0 %v278
    %399 = vmatpush.msra.mxu0 %v277
    %400 = vmatpush.msra.mxu0 %v276
    %401 = vmatpush.msra.mxu0 %v275
    %402 = vmatpush.msra.mxu0 %v274
    %403 = vmatpush.msra.mxu0 %v273
    %404 = vmatpush.msra.mxu0 %v272
    %405 = vmatpush.msra.mxu0 %v271
    %406 = vmatpush.msra.mxu0 %v270
    %407 = vmatpush.msra.mxu0 %v269
    %408 = vmatpush.msra.mxu0 %v268
    %409 = vmatpush.msra.mxu0 %v267
    %410 = vmatmul.f32.gmra.mxu0 %v393
    %v411 = vpop.f32.mrf.mxu0
    %v412 = vadd.f32 0.0, %v411
    %413 = vdwg.mxu0
    %v414 = vadd.f32 %v262, %v412
    %v415 = vtanh.pop %v414
    %416 = vmatpush.msra.mxu0 %v282
    %417 = vmatpush.msra.mxu0 %v281
    %418 = vmatpush.msra.mxu0 %v280
    %419 = vmatpush.msra.mxu0 %v279
    %420 = vmatpush.msra.mxu0 %v278
    %421 = vmatpush.msra.mxu0 %v277
    %422 = vmatpush.msra.mxu0 %v276
    %423 = vmatpush.msra.mxu0 %v275
    %424 = vmatpush.msra.mxu0 %v274
    %425 = vmatpush.msra.mxu0 %v273
    %426 = vmatpush.msra.mxu0 %v272
    %427 = vmatpush.msra.mxu0 %v271
    %428 = vmatpush.msra.mxu0 %v270
    %429 = vmatpush.msra.mxu0 %v269
    %430 = vmatpush.msra.mxu0 %v268
    %431 = vmatpush.msra.mxu0 %v267
    %432 = vmatmul.f32.gmra.mxu0 %v415
    %v433 = vpop.f32.mrf.mxu0
    %v434 = vadd.f32 0.0, %v433
    %435 = vdwg.mxu0
    %v436 = vadd.f32 %v265, %v434
    %v437 = vtanh.pop %v436
    %s438 = scalar_lea.vmem [#allocation7], 128
    %v439 = vld [vmem:[%s438] sm:$0xff]
    %v440 = vld [vmem:[%s438 + $0x8] sm:$0xff]
    %v441 = vld [vmem:[%s438 + $0x10] sm:$0xff]
    %v442 = vld [vmem:[%s438 + $0x18] sm:$0xff]
    %v443 = vld [vmem:[%s438 + $0x20] sm:$0xff]
    %v444 = vld [vmem:[%s438 + $0x28] sm:$0xff]
    %v445 = vld [vmem:[%s438 + $0x30] sm:$0xff]
    %v446 = vld [vmem:[%s438 + $0x38] sm:$0xff]
    %v447 = vld [vmem:[%s438 + $0x40] sm:$0xff]
    %v448 = vld [vmem:[%s438 + $0x48] sm:$0xff]
    %v449 = vld [vmem:[%s438 + $0x50] sm:$0xff]
    %v450 = vld [vmem:[%s438 + $0x58] sm:$0xff]
    %v451 = vld [vmem:[%s438 + $0x60] sm:$0xff]
    %v452 = vld [vmem:[%s438 + $0x68] sm:$0xff]
    %v453 = vld [vmem:[%s438 + $0x70] sm:$0xff]
    %v454 = vld [vmem:[%s438 + $0x78] sm:$0xff]
    %s455 = scalar_lea.vmem [#allocation9], 128
    %v456 = vld [vmem:[%s455] sm:$0xff]
    %v457 = vld [vmem:[%s455 + $0x8] sm:$0xff]
    %v458 = vld [vmem:[%s455 + $0x10] sm:$0xff]
    %v459 = vld [vmem:[%s455 + $0x18] sm:$0xff]
    %v460 = vld [vmem:[%s455 + $0x20] sm:$0xff]
    %v461 = vld [vmem:[%s455 + $0x28] sm:$0xff]
    %v462 = vld [vmem:[%s455 + $0x30] sm:$0xff]
    %v463 = vld [vmem:[%s455 + $0x38] sm:$0xff]
    %v464 = vld [vmem:[%s455 + $0x40] sm:$0xff]
    %v465 = vld [vmem:[%s455 + $0x48] sm:$0xff]
    %v466 = vld [vmem:[%s455 + $0x50] sm:$0xff]
    %v467 = vld [vmem:[%s455 + $0x58] sm:$0xff]
    %v468 = vld [vmem:[%s455 + $0x60] sm:$0xff]
    %v469 = vld [vmem:[%s455 + $0x68] sm:$0xff]
    %v470 = vld [vmem:[%s455 + $0x70] sm:$0xff]
    %v471 = vld [vmem:[%s455 + $0x78] sm:$0xff]
    %s472 = scalar_lea.vmem %s2, 1
    %v473 = vld [vmem:[%s472] sm:$0x1]
    %v475 = vperm.slane %v473, 0
    %477 = vmatpush.msra.mxu0 %v454
    %478 = vmatpush.msra.mxu0 %v453
    %479 = vmatpush.msra.mxu0 %v452
    %480 = vmatpush.msra.mxu0 %v451
    %481 = vmatpush.msra.mxu0 %v450
    %482 = vmatpush.msra.mxu0 %v449
    %483 = vmatpush.msra.mxu0 %v448
    %484 = vmatpush.msra.mxu0 %v447
    %485 = vmatpush.msra.mxu0 %v446
    %486 = vmatpush.msra.mxu0 %v445
    %487 = vmatpush.msra.mxu0 %v444
    %488 = vmatpush.msra.mxu0 %v443
    %489 = vmatpush.msra.mxu0 %v442
    %490 = vmatpush.msra.mxu0 %v441
    %491 = vmatpush.msra.mxu0 %v440
    %492 = vmatpush.msra.mxu0 %v439
    %493 = vmatmul.f32.gmra.mxu0 %v283
    %v494 = vpop.f32.mrf.mxu0
    %v495 = vadd.f32 %v475, %v494
    %496 = vdwg.mxu0
    %v497 = vtanh.pop %v495
    %498 = vmatpush.msra.mxu0 %v454
    %499 = vmatpush.msra.mxu0 %v453
    %500 = vmatpush.msra.mxu0 %v452
    %501 = vmatpush.msra.mxu0 %v451
    %502 = vmatpush.msra.mxu0 %v450
    %503 = vmatpush.msra.mxu0 %v449
    %504 = vmatpush.msra.mxu0 %v448
    %505 = vmatpush.msra.mxu0 %v447
    %506 = vmatpush.msra.mxu0 %v446
    %507 = vmatpush.msra.mxu0 %v445
    %508 = vmatpush.msra.mxu0 %v444
    %509 = vmatpush.msra.mxu0 %v443
    %510 = vmatpush.msra.mxu0 %v442
    %511 = vmatpush.msra.mxu0 %v441
    %512 = vmatpush.msra.mxu0 %v440
    %513 = vmatpush.msra.mxu0 %v439
    %514 = vmatmul.f32.gmra.mxu0 %v305
    %v515 = vpop.f32.mrf.mxu0
    %v516 = vadd.f32 %v475, %v515
    %517 = vdwg.mxu0
    %518 = vmatpush.msra.mxu0 %v471
    %519 = vmatpush.msra.mxu0 %v470
    %520 = vmatpush.msra.mxu0 %v469
    %521 = vmatpush.msra.mxu0 %v468
    %522 = vmatpush.msra.mxu0 %v467
    %523 = vmatpush.msra.mxu0 %v466
    %524 = vmatpush.msra.mxu0 %v465
    %525 = vmatpush.msra.mxu0 %v464
    %526 = vmatpush.msra.mxu0 %v463
    %527 = vmatpush.msra.mxu0 %v462
    %528 = vmatpush.msra.mxu0 %v461
    %529 = vmatpush.msra.mxu0 %v460
    %530 = vmatpush.msra.mxu0 %v459
    %531 = vmatpush.msra.mxu0 %v458
    %532 = vmatpush.msra.mxu0 %v457
    %533 = vmatpush.msra.mxu0 %v456
    %534 = vmatmul.f32.gmra.mxu0 %v497
    %v535 = vpop.f32.mrf.mxu0
    %v536 = vadd.f32 0.0, %v535
    %537 = vdwg.mxu0
    %v538 = vadd.f32 %v516, %v536
    %v539 = vtanh.pop %v538
    %540 = vmatpush.msra.mxu0 %v454
    %541 = vmatpush.msra.mxu0 %v453
    %542 = vmatpush.msra.mxu0 %v452
    %543 = vmatpush.msra.mxu0 %v451
    %544 = vmatpush.msra.mxu0 %v450
    %545 = vmatpush.msra.mxu0 %v449
    %546 = vmatpush.msra.mxu0 %v448
    %547 = vmatpush.msra.mxu0 %v447
    %548 = vmatpush.msra.mxu0 %v446
    %549 = vmatpush.msra.mxu0 %v445
    %550 = vmatpush.msra.mxu0 %v444
    %551 = vmatpush.msra.mxu0 %v443
    %552 = vmatpush.msra.mxu0 %v442
    %553 = vmatpush.msra.mxu0 %v441
    %554 = vmatpush.msra.mxu0 %v440
    %555 = vmatpush.msra.mxu0 %v439
    %556 = vmatmul.f32.gmra.mxu0 %v327
    %v557 = vpop.f32.mrf.mxu0
    %v558 = vadd.f32 %v475, %v557
    %559 = vdwg.mxu0
    %560 = vmatpush.msra.mxu0 %v471
    %561 = vmatpush.msra.mxu0 %v470
    %562 = vmatpush.msra.mxu0 %v469
    %563 = vmatpush.msra.mxu0 %v468
    %564 = vmatpush.msra.mxu0 %v467
    %565 = vmatpush.msra.mxu0 %v466
    %566 = vmatpush.msra.mxu0 %v465
    %567 = vmatpush.msra.mxu0 %v464
    %568 = vmatpush.msra.mxu0 %v463
    %569 = vmatpush.msra.mxu0 %v462
    %570 = vmatpush.msra.mxu0 %v461
    %571 = vmatpush.msra.mxu0 %v460
    %572 = vmatpush.msra.mxu0 %v459
    %573 = vmatpush.msra.mxu0 %v458
    %574 = vmatpush.msra.mxu0 %v457
    %575 = vmatpush.msra.mxu0 %v456
    %576 = vmatmul.f32.gmra.mxu0 %v539
    %v577 = vpop.f32.mrf.mxu0
    %v578 = vadd.f32 0.0, %v577
    %579 = vdwg.mxu0
    %v580 = vadd.f32 %v558, %v578
    %v581 = vtanh.pop %v580
    %582 = vmatpush.msra.mxu0 %v454
    %583 = vmatpush.msra.mxu0 %v453
    %584 = vmatpush.msra.mxu0 %v452
    %585 = vmatpush.msra.mxu0 %v451
    %586 = vmatpush.msra.mxu0 %v450
    %587 = vmatpush.msra.mxu0 %v449
    %588 = vmatpush.msra.mxu0 %v448
    %589 = vmatpush.msra.mxu0 %v447
    %590 = vmatpush.msra.mxu0 %v446
    %591 = vmatpush.msra.mxu0 %v445
    %592 = vmatpush.msra.mxu0 %v444
    %593 = vmatpush.msra.mxu0 %v443
    %594 = vmatpush.msra.mxu0 %v442
    %595 = vmatpush.msra.mxu0 %v441
    %596 = vmatpush.msra.mxu0 %v440
    %597 = vmatpush.msra.mxu0 %v439
    %598 = vmatmul.f32.gmra.mxu0 %v349
    %v599 = vpop.f32.mrf.mxu0
    %v600 = vadd.f32 %v475, %v599
    %601 = vdwg.mxu0
    %602 = vmatpush.msra.mxu0 %v471
    %603 = vmatpush.msra.mxu0 %v470
    %604 = vmatpush.msra.mxu0 %v469
    %605 = vmatpush.msra.mxu0 %v468
    %606 = vmatpush.msra.mxu0 %v467
    %607 = vmatpush.msra.mxu0 %v466
    %608 = vmatpush.msra.mxu0 %v465
    %609 = vmatpush.msra.mxu0 %v464
    %610 = vmatpush.msra.mxu0 %v463
    %611 = vmatpush.msra.mxu0 %v462
    %612 = vmatpush.msra.mxu0 %v461
    %613 = vmatpush.msra.mxu0 %v460
    %614 = vmatpush.msra.mxu0 %v459
    %615 = vmatpush.msra.mxu0 %v458
    %616 = vmatpush.msra.mxu0 %v457
    %617 = vmatpush.msra.mxu0 %v456
    %618 = vmatmul.f32.gmra.mxu0 %v581
    %v619 = vpop.f32.mrf.mxu0
    %v620 = vadd.f32 0.0, %v619
    %621 = vdwg.mxu0
    %v622 = vadd.f32 %v600, %v620
    %v623 = vtanh.pop %v622
    %624 = vmatpush.msra.mxu0 %v454
    %625 = vmatpush.msra.mxu0 %v453
    %626 = vmatpush.msra.mxu0 %v452
    %627 = vmatpush.msra.mxu0 %v451
    %628 = vmatpush.msra.mxu0 %v450
    %629 = vmatpush.msra.mxu0 %v449
    %630 = vmatpush.msra.mxu0 %v448
    %631 = vmatpush.msra.mxu0 %v447
    %632 = vmatpush.msra.mxu0 %v446
    %633 = vmatpush.msra.mxu0 %v445
    %634 = vmatpush.msra.mxu0 %v444
    %635 = vmatpush.msra.mxu0 %v443
    %636 = vmatpush.msra.mxu0 %v442
    %637 = vmatpush.msra.mxu0 %v441
    %638 = vmatpush.msra.mxu0 %v440
    %639 = vmatpush.msra.mxu0 %v439
    %640 = vmatmul.f32.gmra.mxu0 %v371
    %v641 = vpop.f32.mrf.mxu0
    %v642 = vadd.f32 %v475, %v641
    %643 = vdwg.mxu0
    %644 = vmatpush.msra.mxu0 %v471
    %645 = vmatpush.msra.mxu0 %v470
    %646 = vmatpush.msra.mxu0 %v469
    %647 = vmatpush.msra.mxu0 %v468
    %648 = vmatpush.msra.mxu0 %v467
    %649 = vmatpush.msra.mxu0 %v466
    %650 = vmatpush.msra.mxu0 %v465
    %651 = vmatpush.msra.mxu0 %v464
    %652 = vmatpush.msra.mxu0 %v463
    %653 = vmatpush.msra.mxu0 %v462
    %654 = vmatpush.msra.mxu0 %v461
    %655 = vmatpush.msra.mxu0 %v460
    %656 = vmatpush.msra.mxu0 %v459
    %657 = vmatpush.msra.mxu0 %v458
    %658 = vmatpush.msra.mxu0 %v457
    %659 = vmatpush.msra.mxu0 %v456
    %660 = vmatmul.f32.gmra.mxu0 %v623
    %v661 = vpop.f32.mrf.mxu0
    %v662 = vadd.f32 0.0, %v661
    %663 = vdwg.mxu0
    %v664 = vadd.f32 %v642, %v662
    %v665 = vtanh.pop %v664
    %666 = vmatpush.msra.mxu0 %v454
    %667 = vmatpush.msra.mxu0 %v453
    %668 = vmatpush.msra.mxu0 %v452
    %669 = vmatpush.msra.mxu0 %v451
    %670 = vmatpush.msra.mxu0 %v450
    %671 = vmatpush.msra.mxu0 %v449
    %672 = vmatpush.msra.mxu0 %v448
    %673 = vmatpush.msra.mxu0 %v447
    %674 = vmatpush.msra.mxu0 %v446
    %675 = vmatpush.msra.mxu0 %v445
    %676 = vmatpush.msra.mxu0 %v444
    %677 = vmatpush.msra.mxu0 %v443
    %678 = vmatpush.msra.mxu0 %v442
    %679 = vmatpush.msra.mxu0 %v441
    %680 = vmatpush.msra.mxu0 %v440
    %681 = vmatpush.msra.mxu0 %v439
    %682 = vmatmul.f32.gmra.mxu0 %v393
    %v683 = vpop.f32.mrf.mxu0
    %v684 = vadd.f32 %v475, %v683
    %685 = vdwg.mxu0
    %686 = vmatpush.msra.mxu0 %v471
    %687 = vmatpush.msra.mxu0 %v470
    %688 = vmatpush.msra.mxu0 %v469
    %689 = vmatpush.msra.mxu0 %v468
    %690 = vmatpush.msra.mxu0 %v467
    %691 = vmatpush.msra.mxu0 %v466
    %692 = vmatpush.msra.mxu0 %v465
    %693 = vmatpush.msra.mxu0 %v464
    %694 = vmatpush.msra.mxu0 %v463
    %695 = vmatpush.msra.mxu0 %v462
    %696 = vmatpush.msra.mxu0 %v461
    %697 = vmatpush.msra.mxu0 %v460
    %698 = vmatpush.msra.mxu0 %v459
    %699 = vmatpush.msra.mxu0 %v458
    %700 = vmatpush.msra.mxu0 %v457
    %701 = vmatpush.msra.mxu0 %v456
    %702 = vmatmul.f32.gmra.mxu0 %v665
    %v703 = vpop.f32.mrf.mxu0
    %v704 = vadd.f32 0.0, %v703
    %705 = vdwg.mxu0
    %v706 = vadd.f32 %v684, %v704
    %v707 = vtanh.pop %v706
    %708 = vmatpush.msra.mxu0 %v454
    %709 = vmatpush.msra.mxu0 %v453
    %710 = vmatpush.msra.mxu0 %v452
    %711 = vmatpush.msra.mxu0 %v451
    %712 = vmatpush.msra.mxu0 %v450
    %713 = vmatpush.msra.mxu0 %v449
    %714 = vmatpush.msra.mxu0 %v448
    %715 = vmatpush.msra.mxu0 %v447
    %716 = vmatpush.msra.mxu0 %v446
    %717 = vmatpush.msra.mxu0 %v445
    %718 = vmatpush.msra.mxu0 %v444
    %719 = vmatpush.msra.mxu0 %v443
    %720 = vmatpush.msra.mxu0 %v442
    %721 = vmatpush.msra.mxu0 %v441
    %722 = vmatpush.msra.mxu0 %v440
    %723 = vmatpush.msra.mxu0 %v439
    %724 = vmatmul.f32.gmra.mxu0 %v415
    %v725 = vpop.f32.mrf.mxu0
    %v726 = vadd.f32 %v475, %v725
    %727 = vdwg.mxu0
    %728 = vmatpush.msra.mxu0 %v471
    %729 = vmatpush.msra.mxu0 %v470
    %730 = vmatpush.msra.mxu0 %v469
    %731 = vmatpush.msra.mxu0 %v468
    %732 = vmatpush.msra.mxu0 %v467
    %733 = vmatpush.msra.mxu0 %v466
    %734 = vmatpush.msra.mxu0 %v465
    %735 = vmatpush.msra.mxu0 %v464
    %736 = vmatpush.msra.mxu0 %v463
    %737 = vmatpush.msra.mxu0 %v462
    %738 = vmatpush.msra.mxu0 %v461
    %739 = vmatpush.msra.mxu0 %v460
    %740 = vmatpush.msra.mxu0 %v459
    %741 = vmatpush.msra.mxu0 %v458
    %742 = vmatpush.msra.mxu0 %v457
    %743 = vmatpush.msra.mxu0 %v456
    %744 = vmatmul.f32.gmra.mxu0 %v707
    %v745 = vpop.f32.mrf.mxu0
    %v746 = vadd.f32 0.0, %v745
    %747 = vdwg.mxu0
    %v748 = vadd.f32 %v726, %v746
    %v749 = vtanh.pop %v748
    %750 = vmatpush.msra.mxu0 %v454
    %751 = vmatpush.msra.mxu0 %v453
    %752 = vmatpush.msra.mxu0 %v452
    %753 = vmatpush.msra.mxu0 %v451
    %754 = vmatpush.msra.mxu0 %v450
    %755 = vmatpush.msra.mxu0 %v449
    %756 = vmatpush.msra.mxu0 %v448
    %757 = vmatpush.msra.mxu0 %v447
    %758 = vmatpush.msra.mxu0 %v446
    %759 = vmatpush.msra.mxu0 %v445
    %760 = vmatpush.msra.mxu0 %v444
    %761 = vmatpush.msra.mxu0 %v443
    %762 = vmatpush.msra.mxu0 %v442
    %763 = vmatpush.msra.mxu0 %v441
    %764 = vmatpush.msra.mxu0 %v440
    %765 = vmatpush.msra.mxu0 %v439
    %766 = vmatmul.f32.gmra.mxu0 %v437
    %v767 = vpop.f32.mrf.mxu0
    %v768 = vadd.f32 %v475, %v767
    %769 = vdwg.mxu0
    %770 = vmatpush.msra.mxu0 %v471
    %771 = vmatpush.msra.mxu0 %v470
    %772 = vmatpush.msra.mxu0 %v469
    %773 = vmatpush.msra.mxu0 %v468
    %774 = vmatpush.msra.mxu0 %v467
    %775 = vmatpush.msra.mxu0 %v466
    %776 = vmatpush.msra.mxu0 %v465
    %777 = vmatpush.msra.mxu0 %v464
    %778 = vmatpush.msra.mxu0 %v463
    %779 = vmatpush.msra.mxu0 %v462
    %780 = vmatpush.msra.mxu0 %v461
    %781 = vmatpush.msra.mxu0 %v460
    %782 = vmatpush.msra.mxu0 %v459
    %783 = vmatpush.msra.mxu0 %v458
    %784 = vmatpush.msra.mxu0 %v457
    %785 = vmatpush.msra.mxu0 %v456
    %786 = vmatmul.f32.gmra.mxu0 %v749
    %v787 = vpop.f32.mrf.mxu0
    %v788 = vadd.f32 0.0, %v787
    %789 = vdwg.mxu0
    %v790 = vadd.f32 %v768, %v788
    %v791 = vtanh.pop %v790
    %v792 = vld [vmem:[#allocation11] sm:$0xff]
    %v793 = vld [vmem:[#allocation11 + $0x8] sm:$0xff]
    %v794 = vld [vmem:[#allocation11 + $0x10] sm:$0xff]
    %v795 = vld [vmem:[#allocation11 + $0x18] sm:$0xff]
    %v796 = vld [vmem:[#allocation11 + $0x20] sm:$0xff]
    %v797 = vld [vmem:[#allocation11 + $0x28] sm:$0xff]
    %v798 = vld [vmem:[#allocation11 + $0x30] sm:$0xff]
    %v799 = vld [vmem:[#allocation11 + $0x38] sm:$0xff]
    %v800 = vld [vmem:[#allocation11 + $0x40] sm:$0xff]
    %v801 = vld [vmem:[#allocation11 + $0x48] sm:$0xff]
    %v802 = vld [vmem:[#allocation11 + $0x50] sm:$0xff]
    %v803 = vld [vmem:[#allocation11 + $0x58] sm:$0xff]
    %v804 = vld [vmem:[#allocation11 + $0x60] sm:$0xff]
    %v805 = vld [vmem:[#allocation11 + $0x68] sm:$0xff]
    %v806 = vld [vmem:[#allocation11 + $0x70] sm:$0xff]
    %v807 = vld [vmem:[#allocation11 + $0x78] sm:$0xff]
    %v808 = vld [vmem:[%s4] sm:$0x1]
    %v810 = vperm.slane %v808, 0
    %812 = vmatpush.msra.mxu0 %v807
    %813 = vmatpush.msra.mxu0 %v806
    %814 = vmatpush.msra.mxu0 %v805
    %815 = vmatpush.msra.mxu0 %v804
    %816 = vmatpush.msra.mxu0 %v803
    %817 = vmatpush.msra.mxu0 %v802
    %818 = vmatpush.msra.mxu0 %v801
    %819 = vmatpush.msra.mxu0 %v800
    %820 = vmatpush.msra.mxu0 %v799
    %821 = vmatpush.msra.mxu0 %v798
    %822 = vmatpush.msra.mxu0 %v797
    %823 = vmatpush.msra.mxu0 %v796
    %824 = vmatpush.msra.mxu0 %v795
    %825 = vmatpush.msra.mxu0 %v794
    %826 = vmatpush.msra.mxu0 %v793
    %827 = vmatpush.msra.mxu0 %v792
    %828 = vmatmul.f32.gmra.mxu0 %v791
    %v829 = vpop.f32.mrf.mxu0
    %v830 = vadd.f32 %v810, %v829
    %831 = vdwg.mxu0
    %832 = vst [vmem:[%s7] sm:$0xff] %v830
    // Predicated region
    $region38: #{baseball_rnn_forward.2} parent=1 // pred_check
      _
    $region39: #{baseball_rnn_forward.2} parent=1 // pred_check_branch
      %834 = sbr.rel (0) target = $region41
    $region40: #{baseball_rnn_forward.2} parent=1 // pred_region
      _
    $region41: #{baseball_rnn_forward.2} parent=1 // pred_fallthru
      _
    // Predicated region
    $region42: #{baseball_rnn_forward.2} parent=1 // pred_check
      _
    $region43: #{baseball_rnn_forward.2} parent=1 // pred_check_branch
      %836 = sbr.rel (0) target = $region45
    $region44: #{baseball_rnn_forward.2} parent=1 // pred_region
      _
    $region45: #{baseball_rnn_forward.2} parent=1 // pred_fallthru
      _
    %837 = vsyncpa [#allocation8], 1
    %838 = vsyncpa [#allocation10], 1

</llo_original>
